<compile_context>
chip_gen: v7x
topology: tpu7x:2x2x1
jax: 0.10.0
libtpu: 0.0.40
codegen_flags: <defaults>
</compile_context>

<pallas_src>
import math
from functools import partial

import jax
import jax.numpy as jnp
from jax.experimental import pallas as pl
from jax.experimental.pallas import tpu as pltpu


def _round_up(x, m):
    return (x + m - 1) // m * m


def _cdiv(a, b):
    return (a + b - 1) // b


def _sigmoid(z, approx):
    # exp goes to the EUP; with approx=True the reciprocal does too (vrcp),
    # leaving the VALU slot free.  Approx error is ~1e-3-level on the gate.
    return pl.reciprocal(1.0 + jnp.exp(-z), approx=approx)


def _embedding_kernel(x_ref, w1_ref, wcat0_ref, bcat0_ref, wcat1_ref,
                      bcat1_ref, o_ref, *, tb, tl, d_out, d_pad,
                      matmul_dtype, approx):
    """x_ref: (TB, TL, E) f32; o_ref: (TB, D, TL).  Weights padded to Dp=128."""
    e = x_ref.shape[-1]
    # Single large-M matmul chain per grid step (no per-batch unroll).  The
    # cast to the matmul dtype happens here on the VPU, hidden under the
    # memory-bound pipeline, so the kernel reads plain f32 from HBM once.
    x = x_ref[...].reshape(tb * tl, e).astype(matmul_dtype)

    # 1x1 conv, no bias: (M, E) @ (E, Dp), f32 accumulation.
    h = jnp.dot(x, w1_ref[...], preferred_element_type=jnp.float32)

    # Two highway layers; gate & linear fused into one (Dp, 2Dp) matmul each.
    for wcat_ref, bcat_ref in ((wcat0_ref, bcat0_ref),
                               (wcat1_ref, bcat1_ref)):
        z = jnp.dot(h.astype(matmul_dtype), wcat_ref[...],
                    preferred_element_type=jnp.float32) + bcat_ref[...]
        g = _sigmoid(z[:, :d_pad], approx)      # gate half (lane-aligned slice)
        nl = z[:, d_pad:]                       # linear half
        # TODO(synk): dropout(p=0.1) on `nl` omitted (eval-mode identity).
        h = h + g * (nl - h)                    # == g*nl + (1-g)*h

    # NCL directly: (M, Dp) -> (Dp, M) on the XLU, then per-batch
    # lane-aligned column slices (TL is a multiple of 128).  The full Dp=128
    # slab is transposed (128-lane-aligned lowering is guaranteed); the D=96
    # row slice happens on the store.
    ht = jnp.transpose(h)
    for b in range(tb):
        o_ref[b] = ht[:d_out, b * tl:(b + 1) * tl].astype(o_ref.dtype)


def _choose_tiles(B, L, *, target_rows=2048, max_tl=1024, min_grid_steps=2):
    """Pick (TB, TL): lane-dense TL, ~target_rows rows/step, >=2 grid steps."""
    tl = min(max_tl, max(128, _round_up(L, 128)))   # always a multiple of 128
    n_l = _cdiv(L, tl)
    cap = max(1, min(B, max(1, target_rows // tl)))
    divisors = [d for d in range(1, B + 1) if B % d == 0 and d <= cap]
    tb = max(divisors)
    # Keep at least `min_grid_steps` grid steps when possible so both v7x
    # TensorCores get work and input/output DMAs overlap with compute.
    while (B // tb) * n_l < min_grid_steps:
        smaller = [d for d in divisors if d < tb]
        if not smaller:
            break
        tb = max(smaller)
    return tb, tl


def embedding_forward(wd_emb, params, *, matmul_dtype=jnp.float32,
                      out_dtype=jnp.float32, approx_sigmoid=True,
                      target_rows=2048):
    """wd_emb: (B, L, E) float32.  Returns (B, D, L) in out_dtype (NCL)."""
    B, L, E = wd_emb.shape
    D = params["w1"].shape[1]
    DP = _round_up(D, 128)
    TB, TL = _choose_tiles(B, L, target_rows=target_rows)

    def pad_cols(w, to):
        return jnp.pad(w, ((0, 0), (0, to - w.shape[1])))

    def pad_sq(w, to):
        return jnp.pad(w, ((0, to - w.shape[0]), (0, to - w.shape[1])))

    # Zero-padded / fused weights (padded channels stay exactly zero through
    # the highway layers, so they never contaminate the real D channels).
    w1p = pad_cols(params["w1"], DP).astype(matmul_dtype)              # (E, Dp)
    wcat0 = jnp.concatenate([pad_sq(params["wg0"], DP),
                             pad_sq(params["wl0"], DP)], 1).astype(matmul_dtype)
    wcat1 = jnp.concatenate([pad_sq(params["wg1"], DP),
                             pad_sq(params["wl1"], DP)], 1).astype(matmul_dtype)
    bcat0 = jnp.concatenate([pad_cols(params["bg0"], DP),
                             pad_cols(params["bl0"], DP)], 1).astype(jnp.float32)
    bcat1 = jnp.concatenate([pad_cols(params["bg1"], DP),
                             pad_cols(params["bl1"], DP)], 1).astype(jnp.float32)

    kernel = partial(_embedding_kernel, tb=TB, tl=TL, d_out=D, d_pad=DP,
                     matmul_dtype=matmul_dtype, approx=approx_sigmoid)
    const = lambda bi, li: (0, 0)   # weights resident for every grid step
    # TODO(synk): pipeline_mode=pl.Buffered(1) on the constant weight specs
    #             would skip double-buffering ~0.3 MiB of resident weights.

    return pl.pallas_call(
        kernel,
        out_shape=jax.ShapeDtypeStruct((B, D, L), out_dtype),
        grid_spec=pltpu.PrefetchScalarGridSpec(
            num_scalar_prefetch=0,
            grid=(B // TB, _cdiv(L, TL)),        # boundary L block is masked
            in_specs=[
                pl.BlockSpec((TB, TL, E), lambda bi, li: (bi, li, 0)),  # x rows
                pl.BlockSpec((E, DP), const),        # conv1d weight (padded)
                pl.BlockSpec((DP, 2 * DP), const),   # highway0 [gate|linear] W
                pl.BlockSpec((1, 2 * DP), const),    # highway0 [gate|linear] b
                pl.BlockSpec((DP, 2 * DP), const),   # highway1 [gate|linear] W
                pl.BlockSpec((1, 2 * DP), const),    # highway1 [gate|linear] b
            ],
            out_specs=pl.BlockSpec((TB, D, TL), lambda bi, li: (bi, 0, li)),
        ),
        compiler_params=pltpu.CompilerParams(
            dimension_semantics=("parallel", "parallel"),
            vmem_limit_bytes=32 * 1024 * 1024),
    )(wd_emb, w1p, wcat0, bcat0, wcat1, bcat1)


def _xavier_uniform(key, fan_in, fan_out):
    limit = math.sqrt(6.0 / (fan_in + fan_out))
    return jax.random.uniform(key, (fan_in, fan_out), jnp.float32,
                              minval=-limit, maxval=limit)


def _conv_bias(key, fan_in, fan_out):
    bound = 1.0 / math.sqrt(fan_in)
    return jax.random.uniform(key, (1, fan_out), jnp.float32,
                              minval=-bound, maxval=bound)


def init_params(key, embedding_size, hidden_size):
    """Synthetic init mirroring the module's parameter shapes.

    PyTorch conv weights are (out, in, 1); we store the transposed (in, out)
    matrices so the kernel can do row-major x @ W matmuls.
    """
    E, D = embedding_size, hidden_size
    ks = jax.random.split(key, 9)
    return {
        "w1":  _xavier_uniform(ks[0], E, D),          # conv1d, no bias
        "wg0": _xavier_uniform(ks[1], D, D),          # highway gate 0
        "bg0": _conv_bias(ks[2], D, D),
        "wl0": _xavier_uniform(ks[3], D, D),          # highway linear 0
        "bl0": _conv_bias(ks[4], D, D),
        "wg1": _xavier_uniform(ks[5], D, D),          # highway gate 1
        "bg1": _conv_bias(ks[6], D, D),
        "wl1": _xavier_uniform(ks[7], D, D),          # highway linear 1
        "bl1": _conv_bias(ks[8], D, D),
    }


def _reference(wd_emb, p):
    """Pure-JAX reference of the PyTorch forward (eval mode)."""
    h = wd_emb @ p["w1"]
    for wg, bg, wl, bl in ((p["wg0"], p["bg0"], p["wl0"], p["bl0"]),
                           (p["wg1"], p["bg1"], p["wl1"], p["bl1"])):
        g = jax.nn.sigmoid(h @ wg + bg)
        nl = h @ wl + bl
        h = g * nl + (1.0 - g) * h
    return h.transpose(0, 2, 1)  # (B, D, L)


if __name__ == "__main__":
    # Small shapes consistent with the module (hidden_size=96).
    B, L, E, D = 2, 8, 64, 96

    key = jax.random.PRNGKey(0)
    k_param, k_x = jax.random.split(key)
    params = init_params(k_param, E, D)
    wd_emb = jax.random.normal(k_x, (B, L, E), jnp.float32)

    ref = _reference(wd_emb, params)

    # Exact-sigmoid f32 path: tight correctness check.
    out = jax.block_until_ready(
        embedding_forward(wd_emb, params, approx_sigmoid=False))
    assert out.shape == (B, D, L), out.shape
    assert jnp.allclose(out, ref, atol=1e-4, rtol=1e-4), "f32 exact mismatch"

    # Default (fast) path: approximate EUP reciprocal inside the gate sigmoid.
    out_fast = jax.block_until_ready(embedding_forward(wd_emb, params))
    assert out_fast.shape == (B, D, L), out_fast.shape
    assert jnp.allclose(out_fast, ref, atol=1e-2, rtol=1e-2), "approx mismatch"

    # bf16 matmul-input path (recommended on v5e/v6e/v7x): f32 accumulation
    # and f32 elementwise math; error compounds over the two highway layers.
    out_bf16 = jax.block_until_ready(
        embedding_forward(wd_emb, params, matmul_dtype=jnp.bfloat16))
    assert out_bf16.shape == (B, D, L), out_bf16.shape
    assert jnp.allclose(out_bf16, ref, atol=5e-2, rtol=5e-2), "bf16 mismatch"

    print("KERNEL_OK")
</pallas_src>

<mosaic_0001>
module attributes {stable_mosaic.version = 11 : i64} {
  func.func @_embedding_kernel(%arg0: i32, %arg1: i32, %arg2: memref<1x128x64xf32, #tpu.memory_space<vmem>>, %arg3: memref<64x128xf32, #tpu.memory_space<vmem>>, %arg4: memref<128x256xf32, #tpu.memory_space<vmem>>, %arg5: memref<1x256xf32, #tpu.memory_space<vmem>>, %arg6: memref<128x256xf32, #tpu.memory_space<vmem>>, %arg7: memref<1x256xf32, #tpu.memory_space<vmem>>, %arg8: memref<1x96x128xf32, #tpu.memory_space<vmem>>) attributes {dimension_semantics = [#tpu.dimension_semantics<parallel>, #tpu.dimension_semantics<parallel>], iteration_bounds = array<i64: 2, 1>, scalar_prefetch = 0 : i64, scratch_operands = 0 : i64, tpu.core_type = #tpu.core_type<tc>, window_params = [{transform_indices = @transform_0, window_bounds = array<i64: 1, 128, 64>}, {pipeline_mode = #tpu.pipeline_mode<synchronous>, transform_indices = @transform_1, window_bounds = array<i64: 64, 128>}, {pipeline_mode = #tpu.pipeline_mode<synchronous>, transform_indices = @transform_2, window_bounds = array<i64: 128, 256>}, {pipeline_mode = #tpu.pipeline_mode<synchronous>, transform_indices = @transform_3, window_bounds = array<i64: 1, 256>}, {pipeline_mode = #tpu.pipeline_mode<synchronous>, transform_indices = @transform_4, window_bounds = array<i64: 128, 256>}, {pipeline_mode = #tpu.pipeline_mode<synchronous>, transform_indices = @transform_5, window_bounds = array<i64: 1, 256>}, {transform_indices = @transform_6, window_bounds = array<i64: 1, 96, 128>}]} {
    %c0 = arith.constant 0 : index
    %c0_0 = arith.constant 0 : index
    %c0_1 = arith.constant 0 : index
    %0 = vector.load %arg2[%c0, %c0_0, %c0_1] : memref<1x128x64xf32, #tpu.memory_space<vmem>>, vector<1x128x64xf32>
    %1 = vector.shape_cast %0 : vector<1x128x64xf32> to vector<128x64xf32>
    %c0_2 = arith.constant 0 : index
    %c0_3 = arith.constant 0 : index
    %2 = vector.load %arg3[%c0_2, %c0_3] : memref<64x128xf32, #tpu.memory_space<vmem>>, vector<64x128xf32>
    %cst = arith.constant dense<0.000000e+00> : vector<128x128xf32>
    %3 = tpu.matmul %1, %2, %cst {dimension_numbers = #tpu.dot_dimension_numbers<[1], [0], [0], [1], [0, 0, 1, 1], [], []>} : vector<128x64xf32>, vector<64x128xf32>, vector<128x128xf32> -> vector<128x128xf32>
    %c0_4 = arith.constant 0 : index
    %c0_5 = arith.constant 0 : index
    %4 = vector.load %arg4[%c0_4, %c0_5] : memref<128x256xf32, #tpu.memory_space<vmem>>, vector<128x256xf32>
    %cst_6 = arith.constant dense<0.000000e+00> : vector<128x256xf32>
    %5 = tpu.matmul %3, %4, %cst_6 {dimension_numbers = #tpu.dot_dimension_numbers<[1], [0], [0], [1], [0, 0, 1, 1], [], []>} : vector<128x128xf32>, vector<128x256xf32>, vector<128x256xf32> -> vector<128x256xf32>
    %c0_7 = arith.constant 0 : index
    %c0_8 = arith.constant 0 : index
    %6 = vector.load %arg5[%c0_7, %c0_8] : memref<1x256xf32, #tpu.memory_space<vmem>>, vector<1x256xf32>
    %7 = vector.broadcast %6 : vector<1x256xf32> to vector<128x256xf32>
    %8 = arith.addf %5, %7 : vector<128x256xf32>
    %9 = vector.extract_strided_slice %8 {offsets = [0, 0], sizes = [128, 128], strides = [1, 1]} : vector<128x256xf32> to vector<128x128xf32>
    %cst_9 = arith.constant 0.000000e+00 : f32
    %10 = vector.broadcast %cst_9 : f32 to vector<128x128xf32>
    %11 = arith.subf %10, %9 : vector<128x128xf32>
    %12 = math.exp %11 : vector<128x128xf32>
    %cst_10 = arith.constant 1.000000e+00 : f32
    %13 = vector.broadcast %cst_10 : f32 to vector<128x128xf32>
    %14 = arith.addf %13, %12 : vector<128x128xf32>
    %15 = tpu.reciprocal %14 : vector<128x128xf32> -> vector<128x128xf32>
    %16 = vector.extract_strided_slice %8 {offsets = [0, 128], sizes = [128, 128], strides = [1, 1]} : vector<128x256xf32> to vector<128x128xf32>
    %17 = arith.subf %16, %3 : vector<128x128xf32>
    %18 = arith.mulf %15, %17 : vector<128x128xf32>
    %19 = arith.addf %3, %18 : vector<128x128xf32>
    %c0_11 = arith.constant 0 : index
    %c0_12 = arith.constant 0 : index
    %20 = vector.load %arg6[%c0_11, %c0_12] : memref<128x256xf32, #tpu.memory_space<vmem>>, vector<128x256xf32>
    %cst_13 = arith.constant dense<0.000000e+00> : vector<128x256xf32>
    %21 = tpu.matmul %19, %20, %cst_13 {dimension_numbers = #tpu.dot_dimension_numbers<[1], [0], [0], [1], [0, 0, 1, 1], [], []>} : vector<128x128xf32>, vector<128x256xf32>, vector<128x256xf32> -> vector<128x256xf32>
    %c0_14 = arith.constant 0 : index
    %c0_15 = arith.constant 0 : index
    %22 = vector.load %arg7[%c0_14, %c0_15] : memref<1x256xf32, #tpu.memory_space<vmem>>, vector<1x256xf32>
    %23 = vector.broadcast %22 : vector<1x256xf32> to vector<128x256xf32>
    %24 = arith.addf %21, %23 : vector<128x256xf32>
    %25 = vector.extract_strided_slice %24 {offsets = [0, 0], sizes = [128, 128], strides = [1, 1]} : vector<128x256xf32> to vector<128x128xf32>
    %cst_16 = arith.constant 0.000000e+00 : f32
    %26 = vector.broadcast %cst_16 : f32 to vector<128x128xf32>
    %27 = arith.subf %26, %25 : vector<128x128xf32>
    %28 = math.exp %27 : vector<128x128xf32>
    %cst_17 = arith.constant 1.000000e+00 : f32
    %29 = vector.broadcast %cst_17 : f32 to vector<128x128xf32>
    %30 = arith.addf %29, %28 : vector<128x128xf32>
    %31 = tpu.reciprocal %30 : vector<128x128xf32> -> vector<128x128xf32>
    %32 = vector.extract_strided_slice %24 {offsets = [0, 128], sizes = [128, 128], strides = [1, 1]} : vector<128x256xf32> to vector<128x128xf32>
    %33 = arith.subf %32, %19 : vector<128x128xf32>
    %34 = arith.mulf %31, %33 : vector<128x128xf32>
    %35 = arith.addf %19, %34 : vector<128x128xf32>
    %36 = tpu.transpose %35, [1, 0] : vector<128x128xf32> -> vector<128x128xf32>
    %37 = vector.extract_strided_slice %36 {offsets = [0, 0], sizes = [96, 128], strides = [1, 1]} : vector<128x128xf32> to vector<96x128xf32>
    %c0_18 = arith.constant 0 : index
    %c0_19 = arith.constant 0 : index
    %c0_20 = arith.constant 0 : index
    %38 = vector.load %arg8[%c0_18, %c0_19, %c0_20] : memref<1x96x128xf32, #tpu.memory_space<vmem>>, vector<1x96x128xf32>
    %39 = vector.shape_cast %38 : vector<1x96x128xf32> to vector<96x128xf32>
    %40 = vector.shape_cast %37 : vector<96x128xf32> to vector<1x96x128xf32>
    tpu.vector_store %arg8[%c0_18, %c0_19, %c0_20], %40 {strides = array<i32>} : memref<1x96x128xf32, #tpu.memory_space<vmem>>, vector<1x96x128xf32>,
    return
  }
  func.func @transform_0(%arg0: i32, %arg1: i32) -> (i32, i32, i32) {
    %c0_i32 = arith.constant 0 : i32
    %c0_i32_0 = arith.constant 0 : i32
    return %arg0, %arg1, %c0_i32 : i32, i32, i32
  }
  func.func @transform_1(%arg0: i32, %arg1: i32) -> (i32, i32) {
    %c0_i32 = arith.constant 0 : i32
    %c0_i32_0 = arith.constant 0 : i32
    %c0_i32_1 = arith.constant 0 : i32
    return %c0_i32, %c0_i32_0 : i32, i32
  }
  func.func @transform_2(%arg0: i32, %arg1: i32) -> (i32, i32) {
    %c0_i32 = arith.constant 0 : i32
    %c0_i32_0 = arith.constant 0 : i32
    %c0_i32_1 = arith.constant 0 : i32
    return %c0_i32, %c0_i32_0 : i32, i32
  }
  func.func @transform_3(%arg0: i32, %arg1: i32) -> (i32, i32) {
    %c0_i32 = arith.constant 0 : i32
    %c0_i32_0 = arith.constant 0 : i32
    %c0_i32_1 = arith.constant 0 : i32
    return %c0_i32, %c0_i32_0 : i32, i32
  }
  func.func @transform_4(%arg0: i32, %arg1: i32) -> (i32, i32) {
    %c0_i32 = arith.constant 0 : i32
    %c0_i32_0 = arith.constant 0 : i32
    %c0_i32_1 = arith.constant 0 : i32
    return %c0_i32, %c0_i32_0 : i32, i32
  }
  func.func @transform_5(%arg0: i32, %arg1: i32) -> (i32, i32) {
    %c0_i32 = arith.constant 0 : i32
    %c0_i32_0 = arith.constant 0 : i32
    %c0_i32_1 = arith.constant 0 : i32
    return %c0_i32, %c0_i32_0 : i32, i32
  }
  func.func @transform_6(%arg0: i32, %arg1: i32) -> (i32, i32, i32) {
    %c0_i32 = arith.constant 0 : i32
    %c0_i32_0 = arith.constant 0 : i32
    return %arg0, %c0_i32, %arg1 : i32, i32, i32
  }
}

</mosaic_0001>

<llo_original>
// kernel: tpu_custom_call.1
$region0: #{tpu_custom_call.1}
  #allocation0 [shape = 'u32[]', space=smem, size = 0x4, offset = 0x4, fixed_abs, tag = 'smem constant byte address 0x4 - core index']
  #allocation1 [shape = 'u32[144,128]{1,0:T(1,128)}', space=vmem, size = 0x12000, scoped, tag = 'internal scratch']
  %s0 = inlined_call_operand.hbm [shape: f32[2,8,64], index: 0, kind: input, shape index: {}]
  %s1 = inlined_call_operand.hbm [shape: f32[64,128], index: 1, kind: input, shape index: {}]
  %s2 = inlined_call_operand.hbm [shape: f32[128,256], index: 2, kind: input, shape index: {}]
  %s3 = inlined_call_operand.vmem [shape: f32[1,256], index: 3, kind: input, shape index: {}]
  %s4 = inlined_call_operand.hbm [shape: f32[128,256], index: 4, kind: input, shape index: {}]
  %s5 = inlined_call_operand.vmem [shape: f32[1,256], index: 5, kind: input, shape index: {}]
  %s6 = inlined_call_operand.vmem [shape: f32[2,96,8], index: 6, kind: output, shape index: {}]
  %s7 = sld [smem:[#allocation0]]
  $region73: #{tpu_custom_call.1} parent=0
    _
  %s9 = ssub.s32 1, %s7
  %s10 = scalar_select 0, %s9, %s7
  $region1: #{tpu_custom_call.1} parent=0
    #allocation2 [shape = 'u8[131072]{0}', space=vmem, size = 0x20000, scoped, tag = 'input window, operand 0']
    #allocation3 [shape = 's32[2]{0}', space=sflag, size = 0x8, scoped, tag = 'scoped memory for tpu_custom_call.1']
    #allocation4 [shape = 'u8[32768]{0}', space=vmem, size = 0x8000, scoped, tag = 'input window, operand 1, single buffered']
    #allocation5 [shape = 's32[1]{0}', space=sflag, size = 0x4, scoped, tag = 'scoped memory for tpu_custom_call.1']
    #allocation6 [shape = 'u8[131072]{0}', space=vmem, size = 0x20000, scoped, tag = 'input window, operand 2, single buffered']
    #allocation7 [shape = 'u8[131072]{0}', space=vmem, size = 0x20000, scoped, tag = 'input window, operand 4, single buffered']
    #allocation8 [shape = 's32[1]{0}', space=sflag, size = 0x4, scoped, tag = 'scoped memory for tpu_custom_call.1']
    %11 = vsyncpa [#allocation3], 0
    %s12 = scalar_lea.sflag [#allocation3], 1
    %13 = vsyncpa %s12, 0
    %14 = vsyncpa [#allocation5], 0
    %15 = vsyncpa [#allocation8], 0
    loop: start=0, step=1, limit=4
    $region2: #{tpu_custom_call.1} parent=1 // loop_pre_header
      _
    $region3: #{tpu_custom_call.1} parent=1 // loop_header
      %s17 = sphi 0, %s21
      %p18 = scmp.ge.s32.totalorder %s17, 4
      %s24 = sphi 0, %s36
      %s25 = sphi 0, %s32
      %s26 = sphi 0, %s24
      %s27 = sphi 0, %s25
      %s28 = sphi 0, %s26
      %s29 = sphi 0, %s27
      %s41 = sphi 0, %s43
      %s44 = sphi 0, %s41
      %s45 = sphi 0, %s44
      %s61 = sphi 0, %s45
      %s65 = sphi 0, %s65
      %s67 = sphi 0, %s65
      %s68 = sphi 0, %s67
      %s82 = sphi 0, %s68
      %s86 = sphi 0, %s86
      %s88 = sphi 0, %s86
      %s89 = sphi 0, %s88
      %s103 = sphi 0, %s89
      %s107 = sphi 0, %s107
      %s109 = sphi 0, %s107
      %s110 = sphi 0, %s109
      %s124 = sphi 0, %s110
      %s128 = sphi 0, %s128
      %s130 = sphi 0, %s128
      %s131 = sphi 0, %s130
      %s145 = sphi 0, %s131
      %s149 = sphi 0, %s149
      %s151 = sphi 0, %s149
      %s152 = sphi 0, %s151
      %s166 = sphi 0, %s152
      %s174 = sphi 0, %s176
      %s177 = sphi 0, %s174
      %s178 = sphi 0, %s177
      %s194 = sphi 0, %s178
    $region4: #{tpu_custom_call.1} parent=1 // loop_header_branch
      %20 = sbr.rel (%p18) target = $region8
    $region5: #{tpu_custom_call.1} parent=1 // loop_body
      %s22 = ssub.s32 %s17, 1
      %s23 = ssub.s32 %s17, 2
      %s30 = sadd.s32 1, %s25
      %p31 = scmp.ge.s32.totalorder %s30, 1
      %s32 = scalar_select %p31, 0, %s30
      %s33 = sadd.s32 1, %s24
      %s34 = scalar_select %p31, %s33, %s24
      %p35 = scmp.ge.s32.totalorder %s34, 2
      %s36 = scalar_select %p35, 0, %s34
      %s37 = ssub.s32 %s24, %s36
      %s38 = ssub.s32 %s25, %s32
      %s39 = sor.u32 %s37, %s38
      %p40 = scmp.eq.s32.totalorder %s39, 0
      %s42 = sadd.s32 %s41, 1
      %s43 = scalar_select %p40, %s41, %s42
      %p46 = pneg %p40
      %p47 = scmp.eq.s32.totalorder %s17, 1
      %p48 = por %p46, %p47
      %p49 = scmp.ne.s32.totalorder %s41, %s44
      %p50 = scmp.eq.s32.totalorder %s17, 0
      %p51 = por %p49, %p50
      %p52 = scmp.ne.s32.totalorder %s41, %s44
      %p53 = scmp.eq.s32.totalorder %s22, 1
      %p54 = por %p52, %p53
      %p55 = scmp.ne.s32.totalorder %s44, %s45
      %p56 = scmp.eq.s32.totalorder %s22, 0
      %p57 = por %p55, %p56
      %p58 = scmp.ne.s32.totalorder %s44, %s45
      %p59 = scmp.eq.s32.totalorder %s23, 1
      %p60 = por %p58, %p59
      %p62 = scmp.ne.s32.totalorder %s45, %s61
      %p63 = scmp.eq.s32.totalorder %s23, 0
      %p64 = por %p62, %p63
      %s66 = sadd.s32 %s65, 1
      %p69 = scmp.eq.s32.totalorder %s17, 1
      %p70 = scmp.ne.s32.totalorder %s65, %s67
      %p71 = scmp.eq.s32.totalorder %s17, 0
      %p72 = por %p70, %p71
      %p73 = scmp.ne.s32.totalorder %s65, %s67
      %p74 = scmp.eq.s32.totalorder %s22, 1
      %p75 = por %p73, %p74
      %p76 = scmp.ne.s32.totalorder %s67, %s68
      %p77 = scmp.eq.s32.totalorder %s22, 0
      %p78 = por %p76, %p77
      %p79 = scmp.ne.s32.totalorder %s67, %s68
      %p80 = scmp.eq.s32.totalorder %s23, 1
      %p81 = por %p79, %p80
      %p83 = scmp.ne.s32.totalorder %s68, %s82
      %p84 = scmp.eq.s32.totalorder %s23, 0
      %p85 = por %p83, %p84
      %s87 = sadd.s32 %s86, 1
      %p90 = scmp.eq.s32.totalorder %s17, 1
      %p91 = scmp.ne.s32.totalorder %s86, %s88
      %p92 = scmp.eq.s32.totalorder %s17, 0
      %p93 = por %p91, %p92
      %p94 = scmp.ne.s32.totalorder %s86, %s88
      %p95 = scmp.eq.s32.totalorder %s22, 1
      %p96 = por %p94, %p95
      %p97 = scmp.ne.s32.totalorder %s88, %s89
      %p98 = scmp.eq.s32.totalorder %s22, 0
      %p99 = por %p97, %p98
      %p100 = scmp.ne.s32.totalorder %s88, %s89
      %p101 = scmp.eq.s32.totalorder %s23, 1
      %p102 = por %p100, %p101
      %p104 = scmp.ne.s32.totalorder %s89, %s103
      %p105 = scmp.eq.s32.totalorder %s23, 0
      %p106 = por %p104, %p105
      %s108 = sadd.s32 %s107, 1
      %p111 = scmp.eq.s32.totalorder %s17, 1
      %p112 = scmp.ne.s32.totalorder %s107, %s109
      %p113 = scmp.eq.s32.totalorder %s17, 0
      %p114 = por %p112, %p113
      %p115 = scmp.ne.s32.totalorder %s107, %s109
      %p116 = scmp.eq.s32.totalorder %s22, 1
      %p117 = por %p115, %p116
      %p118 = scmp.ne.s32.totalorder %s109, %s110
      %p119 = scmp.eq.s32.totalorder %s22, 0
      %p120 = por %p118, %p119
      %p121 = scmp.ne.s32.totalorder %s109, %s110
      %p122 = scmp.eq.s32.totalorder %s23, 1
      %p123 = por %p121, %p122
      %p125 = scmp.ne.s32.totalorder %s110, %s124
      %p126 = scmp.eq.s32.totalorder %s23, 0
      %p127 = por %p125, %p126
      %s129 = sadd.s32 %s128, 1
      %p132 = scmp.eq.s32.totalorder %s17, 1
      %p133 = scmp.ne.s32.totalorder %s128, %s130
      %p134 = scmp.eq.s32.totalorder %s17, 0
      %p135 = por %p133, %p134
      %p136 = scmp.ne.s32.totalorder %s128, %s130
      %p137 = scmp.eq.s32.totalorder %s22, 1
      %p138 = por %p136, %p137
      %p139 = scmp.ne.s32.totalorder %s130, %s131
      %p140 = scmp.eq.s32.totalorder %s22, 0
      %p141 = por %p139, %p140
      %p142 = scmp.ne.s32.totalorder %s130, %s131
      %p143 = scmp.eq.s32.totalorder %s23, 1
      %p144 = por %p142, %p143
      %p146 = scmp.ne.s32.totalorder %s131, %s145
      %p147 = scmp.eq.s32.totalorder %s23, 0
      %p148 = por %p146, %p147
      %s150 = sadd.s32 %s149, 1
      %p153 = scmp.eq.s32.totalorder %s17, 1
      %p154 = scmp.ne.s32.totalorder %s149, %s151
      %p155 = scmp.eq.s32.totalorder %s17, 0
      %p156 = por %p154, %p155
      %p157 = scmp.ne.s32.totalorder %s149, %s151
      %p158 = scmp.eq.s32.totalorder %s22, 1
      %p159 = por %p157, %p158
      %p160 = scmp.ne.s32.totalorder %s151, %s152
      %p161 = scmp.eq.s32.totalorder %s22, 0
      %p162 = por %p160, %p161
      %p163 = scmp.ne.s32.totalorder %s151, %s152
      %p164 = scmp.eq.s32.totalorder %s23, 1
      %p165 = por %p163, %p164
      %p167 = scmp.ne.s32.totalorder %s152, %s166
      %p168 = scmp.eq.s32.totalorder %s23, 0
      %p169 = por %p167, %p168
      %s170 = ssub.s32 %s24, %s36
      %s171 = ssub.s32 %s25, %s32
      %s172 = sor.u32 %s170, %s171
      %p173 = scmp.eq.s32.totalorder %s172, 0
      %s175 = sadd.s32 %s174, 1
      %s176 = scalar_select %p173, %s174, %s175
      %p179 = pneg %p173
      %p180 = scmp.eq.s32.totalorder %s17, 1
      %p181 = por %p179, %p180
      %p182 = scmp.ne.s32.totalorder %s174, %s177
      %p183 = scmp.eq.s32.totalorder %s17, 0
      %p184 = por %p182, %p183
      %p185 = scmp.ne.s32.totalorder %s174, %s177
      %p186 = scmp.eq.s32.totalorder %s22, 1
      %p187 = por %p185, %p186
      %p188 = scmp.ne.s32.totalorder %s177, %s178
      %p189 = scmp.eq.s32.totalorder %s22, 0
      %p190 = por %p188, %p189
      %p191 = scmp.ne.s32.totalorder %s177, %s178
      %p192 = scmp.eq.s32.totalorder %s23, 1
      %p193 = por %p191, %p192
      %p195 = scmp.ne.s32.totalorder %s178, %s194
      %p196 = scmp.eq.s32.totalorder %s23, 0
      %p197 = por %p195, %p196
      %p198 = scmp.le.s32.totalorder 1, %s17
      %p199 = scmp.lt.s32.totalorder %s17, 3
      %p200 = pnand %p198, %p199
      %p201 = pneg %p200
      // Predicated region
      $region9: #{tpu_custom_call.1} parent=5 // pred_check
        _
      $region10: #{tpu_custom_call.1} parent=5 // pred_check_branch
        %203 = sbr.rel (%p200) target = $region12
      $region11: #{tpu_custom_call.1} parent=5 // pred_region
        %s204 = ssub.s32 %s17, 1
        // Predicated region
        $region13: #{tpu_custom_call.1} parent=11 // pred_check
          %p205 = pneg %p78
        $region14: #{tpu_custom_call.1} parent=11 // pred_check_branch
          %207 = sbr.rel (%p205) target = $region16
        $region15: #{tpu_custom_call.1} parent=11 // pred_region
          %s209 = ssub.s32 1024, 1024
          %210 = vsyncadd [#allocation5], %s209
          %s211 = sshll.u32 [#allocation4], 4
          %s212 = int_to_ptr.vmem [resolvable:$true] %s211
          %217 = dma.hbm_to_vmem [thread:$0]  %s1, 1024, %s212, [#allocation5], 128, 128, 8
        $region16: #{tpu_custom_call.1} parent=11 // pred_fallthru
          _
        // Predicated region
        $region17: #{tpu_custom_call.1} parent=11 // pred_check
          %p218 = pneg %p99
        $region18: #{tpu_custom_call.1} parent=11 // pred_check_branch
          %220 = sbr.rel (%p218) target = $region20
        $region19: #{tpu_custom_call.1} parent=11 // pred_region
          %s222 = ssub.s32 4096, 4096
          %223 = vsyncadd [#allocation5], %s222
          %s224 = sshll.u32 [#allocation6], 4
          %s225 = int_to_ptr.vmem [resolvable:$true] %s224
          %230 = dma.hbm_to_vmem [thread:$0]  %s2, 4096, %s225, [#allocation5], 256, 256, 16
        $region20: #{tpu_custom_call.1} parent=11 // pred_fallthru
          _
        // Predicated region
        $region21: #{tpu_custom_call.1} parent=11 // pred_check
          %p231 = pneg %p120
        $region22: #{tpu_custom_call.1} parent=11 // pred_check_branch
          %233 = sbr.rel (%p231) target = $region24
        $region23: #{tpu_custom_call.1} parent=11 // pred_region
          _
        $region24: #{tpu_custom_call.1} parent=11 // pred_fallthru
          _
        // Predicated region
        $region25: #{tpu_custom_call.1} parent=11 // pred_check
          %p234 = pneg %p141
        $region26: #{tpu_custom_call.1} parent=11 // pred_check_branch
          %236 = sbr.rel (%p234) target = $region28
        $region27: #{tpu_custom_call.1} parent=11 // pred_region
          %s238 = ssub.s32 4096, 4096
          %239 = vsyncadd [#allocation8], %s238
          %s240 = sshll.u32 [#allocation7], 4
          %s241 = int_to_ptr.vmem [resolvable:$true] %s240
          %246 = dma.hbm_to_vmem [thread:$0]  %s4, 4096, %s241, [#allocation8], 256, 256, 16
        $region28: #{tpu_custom_call.1} parent=11 // pred_fallthru
          _
        // Predicated region
        $region29: #{tpu_custom_call.1} parent=11 // pred_check
          %p247 = pneg %p162
        $region30: #{tpu_custom_call.1} parent=11 // pred_check_branch
          %249 = sbr.rel (%p247) target = $region32
        $region31: #{tpu_custom_call.1} parent=11 // pred_region
          _
        $region32: #{tpu_custom_call.1} parent=11 // pred_fallthru
          _
      $region12: #{tpu_custom_call.1} parent=5 // pred_fallthru
        _
      %p250 = scmp.lt.s32.totalorder %s17, 2
      // Predicated region
      $region33: #{tpu_custom_call.1} parent=5 // pred_check
        %p251 = pneg %p250
      $region34: #{tpu_custom_call.1} parent=5 // pred_check_branch
        %253 = sbr.rel (%p251) target = $region36
      $region35: #{tpu_custom_call.1} parent=5 // pred_region
        // Predicated region
        $region37: #{tpu_custom_call.1} parent=35 // pred_check
          %p254 = pneg %p51
        $region38: #{tpu_custom_call.1} parent=35 // pred_check_branch
          %256 = sbr.rel (%p254) target = $region40
        $region39: #{tpu_custom_call.1} parent=35 // pred_region
          %s257 = sand.u32 %s41, 1
          %s258 = scalar_lea.sflag [#allocation3], %s257
          %s259 = sand.u32 %s41, 1
          %s260 = smul.addr %s259, 128
          %s261 = scalar_lea.vmem [#allocation2], %s260
          %s262 = smul.u32 16, %s25
          %s263 = ssub.s32 1, %s262
          %s264 = smul.u32 128, %s263
          %s266 = ssub.s32 2048, %s264
          %267 = vsyncadd %s258, %s266
          %p268 = scmp.ne.s32.totalorder 0, %s264
          %s269 = sadd.s32 %s262, %s24
          %s270 = smul.addr %s269, 128
          %s271 = scalar_lea.hbm %s0, %s270
          %s272 = smul.u32 8, %s263
          %s273 = sshll.u32 %s261, 4
          %s274 = int_to_ptr.vmem [resolvable:$true] %s273
          %s275 = sshll.u32 %s272, 4
          %279 = dma.hbm_to_vmem [thread:$0]  (%p268), %s271, %s275, %s274, %s258, 128, 128, 8
        $region40: #{tpu_custom_call.1} parent=35 // pred_fallthru
          _
      $region36: #{tpu_custom_call.1} parent=5 // pred_fallthru
        _
      %p280 = scmp.le.s32.totalorder 1, %s17
      %p281 = scmp.lt.s32.totalorder %s17, 3
      %p282 = pnand %p280, %p281
      %p283 = pneg %p282
      // Predicated region
      $region41: #{tpu_custom_call.1} parent=5 // pred_check
        _
      $region42: #{tpu_custom_call.1} parent=5 // pred_check_branch
        %285 = sbr.rel (%p282) target = $region44
      $region43: #{tpu_custom_call.1} parent=5 // pred_region
        %s286 = ssub.s32 %s17, 1
        %s287 = sand.u32 %s44, 1
        %s288 = scalar_lea.sflag [#allocation3], %s287
        %s289 = sand.u32 %s44, 1
        %s290 = smul.addr %s289, 128
        %s291 = scalar_lea.vmem [#allocation2], %s290
        // Predicated region
        $region45: #{tpu_custom_call.1} parent=43 // pred_check
          %p292 = pneg %p57
        $region46: #{tpu_custom_call.1} parent=43 // pred_check_branch
          %294 = sbr.rel (%p292) target = $region48
        $region47: #{tpu_custom_call.1} parent=43 // pred_region
          %295 = dma.done %s288, 2048
        $region48: #{tpu_custom_call.1} parent=43 // pred_fallthru
          _
        // Predicated region
        $region49: #{tpu_custom_call.1} parent=43 // pred_check
          %p296 = pneg %p78
        $region50: #{tpu_custom_call.1} parent=43 // pred_check_branch
          %298 = sbr.rel (%p296) target = $region52
        $region51: #{tpu_custom_call.1} parent=43 // pred_region
          %299 = dma.done [#allocation5], 1024
        $region52: #{tpu_custom_call.1} parent=43 // pred_fallthru
          _
        // Predicated region
        $region53: #{tpu_custom_call.1} parent=43 // pred_check
          %p300 = pneg %p99
        $region54: #{tpu_custom_call.1} parent=43 // pred_check_branch
          %302 = sbr.rel (%p300) target = $region56
        $region55: #{tpu_custom_call.1} parent=43 // pred_region
          %303 = dma.done [#allocation5], 4096
        $region56: #{tpu_custom_call.1} parent=43 // pred_fallthru
          _
        // Predicated region
        $region57: #{tpu_custom_call.1} parent=43 // pred_check
          %p304 = pneg %p141
        $region58: #{tpu_custom_call.1} parent=43 // pred_check_branch
          %306 = sbr.rel (%p304) target = $region60
        $region59: #{tpu_custom_call.1} parent=43 // pred_region
          %307 = dma.done [#allocation8], 4096
        $region60: #{tpu_custom_call.1} parent=43 // pred_fallthru
          _
        %s308 = sand.u32 %s44, 1
        %s309 = scalar_lea.sflag [#allocation3], %s308
        %s310 = sand.u32 %s44, 1
        %s311 = smul.addr %s310, 128
        %s312 = scalar_lea.vmem [#allocation2], %s311
        %p313 = pneg %p57
        %p314 = pneg %p54
        %p315 = pneg %p78
        %p316 = pneg %p75
        %p317 = pneg %p99
        %p318 = pneg %p96
        %p319 = pneg %p120
        %p320 = pneg %p117
        %p321 = pneg %p141
        %p322 = pneg %p138
        %p323 = pneg %p162
        %p324 = pneg %p159
        %p325 = pneg %p190
        %p326 = pneg %p187
        %p327 = scmp.lt.s32.totalorder %s26, 1
        %s328 = scalar_select %p327, %s26, 1
        %p329 = scmp.lt.s32.totalorder %s27, 0
        %s330 = scalar_select %p329, %s27, 0
        %s331 = smul.addr %s328, 12
        %s332 = sadd.s32 %s330, %s331
        %s333 = smul.addr %s332, 8
        %s334 = scalar_lea.vmem %s6, %s333
        %s335 = smul.u32 16, %s27
        %s336 = ssub.s32 1, %s335
        %s337 = smul.u32 128, %s336
        %p338 = scmp.lt.s32.totalorder %s26, 1
        %s339 = scalar_select %p338, %s26, 1
        %p340 = scmp.lt.s32.totalorder %s27, 0
        %s341 = scalar_select %p340, %s27, 0
        %s342 = smul.addr %s339, 12
        %s343 = sadd.s32 %s341, %s342
        %s344 = smul.addr %s343, 8
        %s345 = scalar_lea.vmem %s6, %s344
        %v346 = vld [vmem:[%s291] sm:$0xff]
        %v347 = vld [vmem:[%s291 + $0x8] sm:$0xff]
        %v348 = vld [vmem:[%s291 + $0x10] sm:$0xff]
        %v349 = vld [vmem:[%s291 + $0x18] sm:$0xff]
        %v350 = vld [vmem:[%s291 + $0x20] sm:$0xff]
        %v351 = vld [vmem:[%s291 + $0x28] sm:$0xff]
        %v352 = vld [vmem:[%s291 + $0x30] sm:$0xff]
        %v353 = vld [vmem:[%s291 + $0x38] sm:$0xff]
        %v354 = vld [vmem:[%s291 + $0x40] sm:$0xff]
        %v355 = vld [vmem:[%s291 + $0x48] sm:$0xff]
        %v356 = vld [vmem:[%s291 + $0x50] sm:$0xff]
        %v357 = vld [vmem:[%s291 + $0x58] sm:$0xff]
        %v358 = vld [vmem:[%s291 + $0x60] sm:$0xff]
        %v359 = vld [vmem:[%s291 + $0x68] sm:$0xff]
        %v360 = vld [vmem:[%s291 + $0x70] sm:$0xff]
        %v361 = vld [vmem:[%s291 + $0x78] sm:$0xff]
        %v362 = vld [vmem:[#allocation4] sm:$0xff]
        %v363 = vld [vmem:[#allocation4 + $0x8] sm:$0xff]
        %v364 = vld [vmem:[#allocation4 + $0x10] sm:$0xff]
        %v365 = vld [vmem:[#allocation4 + $0x18] sm:$0xff]
        %v366 = vld [vmem:[#allocation4 + $0x20] sm:$0xff]
        %v367 = vld [vmem:[#allocation4 + $0x28] sm:$0xff]
        %v368 = vld [vmem:[#allocation4 + $0x30] sm:$0xff]
        %v369 = vld [vmem:[#allocation4 + $0x38] sm:$0xff]
        %vm370 = vcmask 523264
        %v372 = vsel %vm370, %v346, 0
        %v375 = vsel %vm370, %v347, 0
        %v378 = vsel %vm370, %v348, 0
        %v381 = vsel %vm370, %v349, 0
        %v384 = vsel %vm370, %v350, 0
        %v387 = vsel %vm370, %v351, 0
        %v390 = vsel %vm370, %v352, 0
        %v393 = vsel %vm370, %v353, 0
        %v396 = vsel %vm370, %v354, 0
        %v399 = vsel %vm370, %v355, 0
        %v402 = vsel %vm370, %v356, 0
        %v405 = vsel %vm370, %v357, 0
        %v408 = vsel %vm370, %v358, 0
        %v411 = vsel %vm370, %v359, 0
        %v414 = vsel %vm370, %v360, 0
        %v417 = vsel %vm370, %v361, 0
        %419 = vmatprep.subr.mxu0 0.0
        %420 = vmatpush1.msra.mxu0 %v362
        %421 = vmatprep.subr.mxu0 0.0
        %422 = vmatpush1.msra.mxu0 %v363
        %423 = vmatprep.subr.mxu0 0.0
        %424 = vmatpush1.msra.mxu0 %v364
        %425 = vmatprep.subr.mxu0 0.0
        %426 = vmatpush1.msra.mxu0 %v365
        %427 = vmatprep.subr.mxu0 0.0
        %428 = vmatpush1.msra.mxu0 %v366
        %429 = vmatprep.subr.mxu0 0.0
        %430 = vmatpush1.msra.mxu0 %v367
        %431 = vmatprep.subr.mxu0 0.0
        %432 = vmatpush1.msra.mxu0 %v368
        %433 = vmatprep.subr.mxu0 0.0
        %434 = vmatpush1.msra.mxu0 %v369
        %435 = vmatprep.subr.mxu0 0.0
        %436 = vmatpush1.msra.mxu0 0.0
        %437 = vmatprep.subr.mxu0 0.0
        %438 = vmatpush1.msra.mxu0 0.0
        %439 = vmatprep.subr.mxu0 0.0
        %440 = vmatpush1.msra.mxu0 0.0
        %441 = vmatprep.subr.mxu0 0.0
        %442 = vmatpush1.msra.mxu0 0.0
        %443 = vmatprep.subr.mxu0 0.0
        %444 = vmatpush1.msra.mxu0 0.0
        %445 = vmatprep.subr.mxu0 0.0
        %446 = vmatpush1.msra.mxu0 0.0
        %447 = vmatprep.subr.mxu0 0.0
        %448 = vmatpush1.msra.mxu0 0.0
        %449 = vmatprep.subr.mxu0 0.0
        %450 = vmatpush1.msra.mxu0 0.0
        %451 = vmatprep.subr.mxu0 0.0
        %452 = vmatpush1.msra.mxu0 0.0
        %453 = vmatprep.subr.mxu0 0.0
        %454 = vmatpush1.msra.mxu0 0.0
        %455 = vmatprep.subr.mxu0 0.0
        %456 = vmatpush1.msra.mxu0 0.0
        %457 = vmatprep.subr.mxu0 0.0
        %458 = vmatpush1.msra.mxu0 0.0
        %459 = vmatprep.subr.mxu0 0.0
        %460 = vmatpush1.msra.mxu0 0.0
        %461 = vmatprep.subr.mxu0 0.0
        %462 = vmatpush1.msra.mxu0 0.0
        %463 = vmatprep.subr.mxu0 0.0
        %464 = vmatpush1.msra.mxu0 0.0
        %465 = vmatprep.subr.mxu0 0.0
        %466 = vmatpush1.msra.mxu0 0.0
        %467 = vmatprep.subr.mxu0 0.0
        %468 = vmatpush1.msra.mxu0 0.0
        %469 = vmatprep.subr.mxu0 0.0
        %470 = vmatpush1.msra.mxu0 0.0
        %471 = vmatprep.subr.mxu0 0.0
        %472 = vmatpush1.msra.mxu0 0.0
        %473 = vmatprep.subr.mxu0 0.0
        %474 = vmatpush1.msra.mxu0 0.0
        %475 = vmatprep.subr.mxu0 0.0
        %476 = vmatpush1.msra.mxu0 0.0
        %477 = vmatprep.subr.mxu0 0.0
        %478 = vmatpush1.msra.mxu0 0.0
        %479 = vmatprep.subr.mxu0 0.0
        %480 = vmatpush1.msra.mxu0 0.0
        %481 = vmatprep.subr.mxu0 0.0
        %482 = vmatpush1.msra.mxu0 0.0
        %483 = vmatprep.mubr.f32.mxu0 0.0
        %484 = vmatmul.mubr.f32.gmra.mrb[0].mxu0 %v372
        %v485 = vpop.f32.mrb[0].mxu0
        %v486 = vadd.f32 0.0, %v485
        %v487 = vpop.f32.mrb[0].mxu0
        %488 = vmatprep.mubr.f32.mxu0 0.0
        %489 = vmatmul.mubr.f32.gmra.mrb[0].mxu0 %v375
        %v490 = vpop.f32.mrb[0].mxu0
        %v491 = vadd.f32 0.0, %v490
        %v492 = vpop.f32.mrb[0].mxu0
        %493 = vmatprep.mubr.f32.mxu0 0.0
        %494 = vmatmul.mubr.f32.gmra.mrb[0].mxu0 %v378
        %v495 = vpop.f32.mrb[0].mxu0
        %v496 = vadd.f32 0.0, %v495
        %v497 = vpop.f32.mrb[0].mxu0
        %498 = vmatprep.mubr.f32.mxu0 0.0
        %499 = vmatmul.mubr.f32.gmra.mrb[0].mxu0 %v381
        %v500 = vpop.f32.mrb[0].mxu0
        %v501 = vadd.f32 0.0, %v500
        %v502 = vpop.f32.mrb[0].mxu0
        %503 = vmatprep.mubr.f32.mxu0 0.0
        %504 = vmatmul.mubr.f32.gmra.mrb[0].mxu0 %v384
        %v505 = vpop.f32.mrb[0].mxu0
        %v506 = vadd.f32 0.0, %v505
        %v507 = vpop.f32.mrb[0].mxu0
        %508 = vmatprep.mubr.f32.mxu0 0.0
        %509 = vmatmul.mubr.f32.gmra.mrb[0].mxu0 %v387
        %v510 = vpop.f32.mrb[0].mxu0
        %v511 = vadd.f32 0.0, %v510
        %v512 = vpop.f32.mrb[0].mxu0
        %513 = vmatprep.mubr.f32.mxu0 0.0
        %514 = vmatmul.mubr.f32.gmra.mrb[0].mxu0 %v390
        %v515 = vpop.f32.mrb[0].mxu0
        %v516 = vadd.f32 0.0, %v515
        %v517 = vpop.f32.mrb[0].mxu0
        %518 = vmatprep.mubr.f32.mxu0 0.0
        %519 = vmatmul.mubr.f32.gmra.mrb[0].mxu0 %v393
        %v520 = vpop.f32.mrb[0].mxu0
        %v521 = vadd.f32 0.0, %v520
        %v522 = vpop.f32.mrb[0].mxu0
        %523 = vmatprep.mubr.f32.mxu0 0.0
        %524 = vmatmul.mubr.f32.gmra.mrb[0].mxu0 %v396
        %v525 = vpop.f32.mrb[0].mxu0
        %v526 = vadd.f32 0.0, %v525
        %v527 = vpop.f32.mrb[0].mxu0
        %528 = vmatprep.mubr.f32.mxu0 0.0
        %529 = vmatmul.mubr.f32.gmra.mrb[0].mxu0 %v399
        %v530 = vpop.f32.mrb[0].mxu0
        %v531 = vadd.f32 0.0, %v530
        %v532 = vpop.f32.mrb[0].mxu0
        %533 = vmatprep.mubr.f32.mxu0 0.0
        %534 = vmatmul.mubr.f32.gmra.mrb[0].mxu0 %v402
        %v535 = vpop.f32.mrb[0].mxu0
        %v536 = vadd.f32 0.0, %v535
        %v537 = vpop.f32.mrb[0].mxu0
        %538 = vmatprep.mubr.f32.mxu0 0.0
        %539 = vmatmul.mubr.f32.gmra.mrb[0].mxu0 %v405
        %v540 = vpop.f32.mrb[0].mxu0
        %v541 = vadd.f32 0.0, %v540
        %v542 = vpop.f32.mrb[0].mxu0
        %543 = vmatprep.mubr.f32.mxu0 0.0
        %544 = vmatmul.mubr.f32.gmra.mrb[0].mxu0 %v408
        %v545 = vpop.f32.mrb[0].mxu0
        %v546 = vadd.f32 0.0, %v545
        %v547 = vpop.f32.mrb[0].mxu0
        %548 = vmatprep.mubr.f32.mxu0 0.0
        %549 = vmatmul.mubr.f32.gmra.mrb[0].mxu0 %v411
        %v550 = vpop.f32.mrb[0].mxu0
        %v551 = vadd.f32 0.0, %v550
        %v552 = vpop.f32.mrb[0].mxu0
        %553 = vmatprep.mubr.f32.mxu0 0.0
        %554 = vmatmul.mubr.f32.gmra.mrb[0].mxu0 %v414
        %v555 = vpop.f32.mrb[0].mxu0
        %v556 = vadd.f32 0.0, %v555
        %v557 = vpop.f32.mrb[0].mxu0
        %558 = vmatprep.mubr.f32.mxu0 0.0
        %559 = vmatmul.mubr.f32.gmra.mrb[0].mxu0 %v417
        %v560 = vpop.f32.mrb[0].mxu0
        %v561 = vadd.f32 0.0, %v560
        %v562 = vpop.f32.mrb[0].mxu0
        %563 = vdwg.mxu0
        %v564 = vld [vmem:[#allocation6] sm:$0xff]
        %v565 = vld [vmem:[#allocation6 + $0x8] sm:$0xff]
        %v566 = vld [vmem:[#allocation6 + $0x10] sm:$0xff]
        %v567 = vld [vmem:[#allocation6 + $0x18] sm:$0xff]
        %v568 = vld [vmem:[#allocation6 + $0x20] sm:$0xff]
        %v569 = vld [vmem:[#allocation6 + $0x28] sm:$0xff]
        %v570 = vld [vmem:[#allocation6 + $0x30] sm:$0xff]
        %v571 = vld [vmem:[#allocation6 + $0x38] sm:$0xff]
        %v572 = vld [vmem:[#allocation6 + $0x40] sm:$0xff]
        %v573 = vld [vmem:[#allocation6 + $0x48] sm:$0xff]
        %v574 = vld [vmem:[#allocation6 + $0x50] sm:$0xff]
        %v575 = vld [vmem:[#allocation6 + $0x58] sm:$0xff]
        %v576 = vld [vmem:[#allocation6 + $0x60] sm:$0xff]
        %v577 = vld [vmem:[#allocation6 + $0x68] sm:$0xff]
        %v578 = vld [vmem:[#allocation6 + $0x70] sm:$0xff]
        %v579 = vld [vmem:[#allocation6 + $0x78] sm:$0xff]
        %v580 = vld [vmem:[#allocation6 + $0x80] sm:$0xff]
        %v581 = vld [vmem:[#allocation6 + $0x88] sm:$0xff]
        %v582 = vld [vmem:[#allocation6 + $0x90] sm:$0xff]
        %v583 = vld [vmem:[#allocation6 + $0x98] sm:$0xff]
        %v584 = vld [vmem:[#allocation6 + $0xa0] sm:$0xff]
        %v585 = vld [vmem:[#allocation6 + $0xa8] sm:$0xff]
        %v586 = vld [vmem:[#allocation6 + $0xb0] sm:$0xff]
        %v587 = vld [vmem:[#allocation6 + $0xb8] sm:$0xff]
        %v588 = vld [vmem:[#allocation6 + $0xc0] sm:$0xff]
        %v589 = vld [vmem:[#allocation6 + $0xc8] sm:$0xff]
        %v590 = vld [vmem:[#allocation6 + $0xd0] sm:$0xff]
        %v591 = vld [vmem:[#allocation6 + $0xd8] sm:$0xff]
        %v592 = vld [vmem:[#allocation6 + $0xe0] sm:$0xff]
        %v593 = vld [vmem:[#allocation6 + $0xe8] sm:$0xff]
        %v594 = vld [vmem:[#allocation6 + $0xf0] sm:$0xff]
        %v595 = vld [vmem:[#allocation6 + $0xf8] sm:$0xff]
        %v596 = vld [vmem:[%s3] sm:$0x3]
        %v598 = vlaneseq
        %v599 = vshrl.u32 %v598, 7
        %v600 = vsub.s32 0, %v599
        %v601 = vrot.slane %v596, %v600
        %v602 = vlaneseq
        %v603 = vshrl.u32 %v602, 7
        %v604 = vsub.s32 1, %v603
        %v605 = vrot.slane %v596, %v604
        %608 = vmatprep.subr.mxu0 %v565
        %609 = vmatpush1.msra.mxu0 %v564
        %610 = vmatprep.subr.mxu0 %v567
        %611 = vmatpush1.msra.mxu0 %v566
        %612 = vmatprep.subr.mxu0 %v569
        %613 = vmatpush1.msra.mxu0 %v568
        %614 = vmatprep.subr.mxu0 %v571
        %615 = vmatpush1.msra.mxu0 %v570
        %616 = vmatprep.subr.mxu0 %v573
        %617 = vmatpush1.msra.mxu0 %v572
        %618 = vmatprep.subr.mxu0 %v575
        %619 = vmatpush1.msra.mxu0 %v574
        %620 = vmatprep.subr.mxu0 %v577
        %621 = vmatpush1.msra.mxu0 %v576
        %622 = vmatprep.subr.mxu0 %v579
        %623 = vmatpush1.msra.mxu0 %v578
        %624 = vmatprep.subr.mxu0 %v581
        %625 = vmatpush1.msra.mxu0 %v580
        %626 = vmatprep.subr.mxu0 %v583
        %627 = vmatpush1.msra.mxu0 %v582
        %628 = vmatprep.subr.mxu0 %v585
        %629 = vmatpush1.msra.mxu0 %v584
        %630 = vmatprep.subr.mxu0 %v587
        %631 = vmatpush1.msra.mxu0 %v586
        %632 = vmatprep.subr.mxu0 %v589
        %633 = vmatpush1.msra.mxu0 %v588
        %634 = vmatprep.subr.mxu0 %v591
        %635 = vmatpush1.msra.mxu0 %v590
        %636 = vmatprep.subr.mxu0 %v593
        %637 = vmatpush1.msra.mxu0 %v592
        %638 = vmatprep.subr.mxu0 %v595
        %639 = vmatpush1.msra.mxu0 %v594
        %640 = vmatprep.subr.mxu0 0.0
        %641 = vmatpush1.msra.mxu0 0.0
        %642 = vmatprep.subr.mxu0 0.0
        %643 = vmatpush1.msra.mxu0 0.0
        %644 = vmatprep.subr.mxu0 0.0
        %645 = vmatpush1.msra.mxu0 0.0
        %646 = vmatprep.subr.mxu0 0.0
        %647 = vmatpush1.msra.mxu0 0.0
        %648 = vmatprep.subr.mxu0 0.0
        %649 = vmatpush1.msra.mxu0 0.0
        %650 = vmatprep.subr.mxu0 0.0
        %651 = vmatpush1.msra.mxu0 0.0
        %652 = vmatprep.subr.mxu0 0.0
        %653 = vmatpush1.msra.mxu0 0.0
        %654 = vmatprep.subr.mxu0 0.0
        %655 = vmatpush1.msra.mxu0 0.0
        %656 = vmatprep.subr.mxu0 0.0
        %657 = vmatpush1.msra.mxu0 0.0
        %658 = vmatprep.subr.mxu0 0.0
        %659 = vmatpush1.msra.mxu0 0.0
        %660 = vmatprep.subr.mxu0 0.0
        %661 = vmatpush1.msra.mxu0 0.0
        %662 = vmatprep.subr.mxu0 0.0
        %663 = vmatpush1.msra.mxu0 0.0
        %664 = vmatprep.subr.mxu0 0.0
        %665 = vmatpush1.msra.mxu0 0.0
        %666 = vmatprep.subr.mxu0 0.0
        %667 = vmatpush1.msra.mxu0 0.0
        %668 = vmatprep.subr.mxu0 0.0
        %669 = vmatpush1.msra.mxu0 0.0
        %670 = vmatprep.subr.mxu0 0.0
        %671 = vmatpush1.msra.mxu0 0.0
        %672 = vmatprep.mubr.f32.mxu0 0.0
        %673 = vmatmul.mubr.f32.gmra.mrb[0].mxu0 %v486
        %v674 = vpop.f32.mrb[0].mxu0
        %v675 = vadd.f32 %v601, %v674
        %v676 = vpop.f32.mrb[0].mxu0
        %v677 = vadd.f32 %v605, %v676
        %678 = vmatprep.mubr.f32.mxu0 0.0
        %679 = vmatmul.mubr.f32.gmra.mrb[0].mxu0 %v491
        %v680 = vpop.f32.mrb[0].mxu0
        %v681 = vadd.f32 %v601, %v680
        %v682 = vpop.f32.mrb[0].mxu0
        %v683 = vadd.f32 %v605, %v682
        %684 = vmatprep.mubr.f32.mxu0 0.0
        %685 = vmatmul.mubr.f32.gmra.mrb[0].mxu0 %v496
        %v686 = vpop.f32.mrb[0].mxu0
        %v687 = vadd.f32 %v601, %v686
        %v688 = vpop.f32.mrb[0].mxu0
        %v689 = vadd.f32 %v605, %v688
        %690 = vmatprep.mubr.f32.mxu0 0.0
        %691 = vmatmul.mubr.f32.gmra.mrb[0].mxu0 %v501
        %v692 = vpop.f32.mrb[0].mxu0
        %v693 = vadd.f32 %v601, %v692
        %v694 = vpop.f32.mrb[0].mxu0
        %v695 = vadd.f32 %v605, %v694
        %696 = vmatprep.mubr.f32.mxu0 0.0
        %697 = vmatmul.mubr.f32.gmra.mrb[0].mxu0 %v506
        %v698 = vpop.f32.mrb[0].mxu0
        %v699 = vadd.f32 %v601, %v698
        %v700 = vpop.f32.mrb[0].mxu0
        %v701 = vadd.f32 %v605, %v700
        %702 = vmatprep.mubr.f32.mxu0 0.0
        %703 = vmatmul.mubr.f32.gmra.mrb[0].mxu0 %v511
        %v704 = vpop.f32.mrb[0].mxu0
        %v705 = vadd.f32 %v601, %v704
        %v706 = vpop.f32.mrb[0].mxu0
        %v707 = vadd.f32 %v605, %v706
        %708 = vmatprep.mubr.f32.mxu0 0.0
        %709 = vmatmul.mubr.f32.gmra.mrb[0].mxu0 %v516
        %v710 = vpop.f32.mrb[0].mxu0
        %v711 = vadd.f32 %v601, %v710
        %v712 = vpop.f32.mrb[0].mxu0
        %v713 = vadd.f32 %v605, %v712
        %714 = vmatprep.mubr.f32.mxu0 0.0
        %715 = vmatmul.mubr.f32.gmra.mrb[0].mxu0 %v521
        %v716 = vpop.f32.mrb[0].mxu0
        %v717 = vadd.f32 %v601, %v716
        %v718 = vpop.f32.mrb[0].mxu0
        %v719 = vadd.f32 %v605, %v718
        %720 = vmatprep.mubr.f32.mxu0 0.0
        %721 = vmatmul.mubr.f32.gmra.mrb[0].mxu0 %v526
        %v722 = vpop.f32.mrb[0].mxu0
        %v723 = vadd.f32 %v601, %v722
        %v724 = vpop.f32.mrb[0].mxu0
        %v725 = vadd.f32 %v605, %v724
        %726 = vmatprep.mubr.f32.mxu0 0.0
        %727 = vmatmul.mubr.f32.gmra.mrb[0].mxu0 %v531
        %v728 = vpop.f32.mrb[0].mxu0
        %v729 = vadd.f32 %v601, %v728
        %v730 = vpop.f32.mrb[0].mxu0
        %v731 = vadd.f32 %v605, %v730
        %732 = vmatprep.mubr.f32.mxu0 0.0
        %733 = vmatmul.mubr.f32.gmra.mrb[0].mxu0 %v536
        %v734 = vpop.f32.mrb[0].mxu0
        %v735 = vadd.f32 %v601, %v734
        %v736 = vpop.f32.mrb[0].mxu0
        %v737 = vadd.f32 %v605, %v736
        %738 = vmatprep.mubr.f32.mxu0 0.0
        %739 = vmatmul.mubr.f32.gmra.mrb[0].mxu0 %v541
        %v740 = vpop.f32.mrb[0].mxu0
        %v741 = vadd.f32 %v601, %v740
        %v742 = vpop.f32.mrb[0].mxu0
        %v743 = vadd.f32 %v605, %v742
        %744 = vmatprep.mubr.f32.mxu0 0.0
        %745 = vmatmul.mubr.f32.gmra.mrb[0].mxu0 %v546
        %v746 = vpop.f32.mrb[0].mxu0
        %v747 = vadd.f32 %v601, %v746
        %v748 = vpop.f32.mrb[0].mxu0
        %v749 = vadd.f32 %v605, %v748
        %750 = vmatprep.mubr.f32.mxu0 0.0
        %751 = vmatmul.mubr.f32.gmra.mrb[0].mxu0 %v551
        %v752 = vpop.f32.mrb[0].mxu0
        %v753 = vadd.f32 %v601, %v752
        %v754 = vpop.f32.mrb[0].mxu0
        %v755 = vadd.f32 %v605, %v754
        %756 = vmatprep.mubr.f32.mxu0 0.0
        %757 = vmatmul.mubr.f32.gmra.mrb[0].mxu0 %v556
        %v758 = vpop.f32.mrb[0].mxu0
        %v759 = vadd.f32 %v601, %v758
        %v760 = vpop.f32.mrb[0].mxu0
        %v761 = vadd.f32 %v605, %v760
        %762 = vmatprep.mubr.f32.mxu0 0.0
        %763 = vmatmul.mubr.f32.gmra.mrb[0].mxu0 %v561
        %v764 = vpop.f32.mrb[0].mxu0
        %v765 = vadd.f32 %v601, %v764
        %v766 = vpop.f32.mrb[0].mxu0
        %v767 = vadd.f32 %v605, %v766
        %768 = vdwg.mxu0
        %v769 = vsub.f32 0.0, %v675
        %v770 = vsub.f32 0.0, %v681
        %v771 = vsub.f32 0.0, %v687
        %v772 = vsub.f32 0.0, %v693
        %v773 = vsub.f32 0.0, %v699
        %v774 = vsub.f32 0.0, %v705
        %v775 = vsub.f32 0.0, %v711
        %v776 = vsub.f32 0.0, %v717
        %v777 = vsub.f32 0.0, %v723
        %v778 = vsub.f32 0.0, %v729
        %v779 = vsub.f32 0.0, %v735
        %v780 = vsub.f32 0.0, %v741
        %v781 = vsub.f32 0.0, %v747
        %v782 = vsub.f32 0.0, %v753
        %v783 = vsub.f32 0.0, %v759
        %v784 = vsub.f32 0.0, %v765
        %v785 = vmul.f32 %v769, 1.442695
        %v786 = vpow.pop %v785
        %v787 = vmul.f32 %v770, 1.442695
        %v788 = vpow.pop %v787
        %v789 = vmul.f32 %v771, 1.442695
        %v790 = vpow.pop %v789
        %v791 = vmul.f32 %v772, 1.442695
        %v792 = vpow.pop %v791
        %v793 = vmul.f32 %v773, 1.442695
        %v794 = vpow.pop %v793
        %v795 = vmul.f32 %v774, 1.442695
        %v796 = vpow.pop %v795
        %v797 = vmul.f32 %v775, 1.442695
        %v798 = vpow.pop %v797
        %v799 = vmul.f32 %v776, 1.442695
        %v800 = vpow.pop %v799
        %v801 = vmul.f32 %v777, 1.442695
        %v802 = vpow.pop %v801
        %v803 = vmul.f32 %v778, 1.442695
        %v804 = vpow.pop %v803
        %v805 = vmul.f32 %v779, 1.442695
        %v806 = vpow.pop %v805
        %v807 = vmul.f32 %v780, 1.442695
        %v808 = vpow.pop %v807
        %v809 = vmul.f32 %v781, 1.442695
        %v810 = vpow.pop %v809
        %v811 = vmul.f32 %v782, 1.442695
        %v812 = vpow.pop %v811
        %v813 = vmul.f32 %v783, 1.442695
        %v814 = vpow.pop %v813
        %v815 = vmul.f32 %v784, 1.442695
        %v816 = vpow.pop %v815
        %v817 = vadd.f32 %v786, 1.0
        %v818 = vadd.f32 %v788, 1.0
        %v819 = vadd.f32 %v790, 1.0
        %v820 = vadd.f32 %v792, 1.0
        %v821 = vadd.f32 %v794, 1.0
        %v822 = vadd.f32 %v796, 1.0
        %v823 = vadd.f32 %v798, 1.0
        %v824 = vadd.f32 %v800, 1.0
        %v825 = vadd.f32 %v802, 1.0
        %v826 = vadd.f32 %v804, 1.0
        %v827 = vadd.f32 %v806, 1.0
        %v828 = vadd.f32 %v808, 1.0
        %v829 = vadd.f32 %v810, 1.0
        %v830 = vadd.f32 %v812, 1.0
        %v831 = vadd.f32 %v814, 1.0
        %v832 = vadd.f32 %v816, 1.0
        %v833 = vrcp.pop %v817
        %v834 = vrcp.pop %v818
        %v835 = vrcp.pop %v819
        %v836 = vrcp.pop %v820
        %v837 = vrcp.pop %v821
        %v838 = vrcp.pop %v822
        %v839 = vrcp.pop %v823
        %v840 = vrcp.pop %v824
        %v841 = vrcp.pop %v825
        %v842 = vrcp.pop %v826
        %v843 = vrcp.pop %v827
        %v844 = vrcp.pop %v828
        %v845 = vrcp.pop %v829
        %v846 = vrcp.pop %v830
        %v847 = vrcp.pop %v831
        %v848 = vrcp.pop %v832
        %v849 = vsub.f32 %v677, %v486
        %v850 = vsub.f32 %v683, %v491
        %v851 = vsub.f32 %v689, %v496
        %v852 = vsub.f32 %v695, %v501
        %v853 = vsub.f32 %v701, %v506
        %v854 = vsub.f32 %v707, %v511
        %v855 = vsub.f32 %v713, %v516
        %v856 = vsub.f32 %v719, %v521
        %v857 = vsub.f32 %v725, %v526
        %v858 = vsub.f32 %v731, %v531
        %v859 = vsub.f32 %v737, %v536
        %v860 = vsub.f32 %v743, %v541
        %v861 = vsub.f32 %v749, %v546
        %v862 = vsub.f32 %v755, %v551
        %v863 = vsub.f32 %v761, %v556
        %v864 = vsub.f32 %v767, %v561
        %v865 = vmul.f32 %v833, %v849
        %v866 = vmul.f32 %v834, %v850
        %v867 = vmul.f32 %v835, %v851
        %v868 = vmul.f32 %v836, %v852
        %v869 = vmul.f32 %v837, %v853
        %v870 = vmul.f32 %v838, %v854
        %v871 = vmul.f32 %v839, %v855
        %v872 = vmul.f32 %v840, %v856
        %v873 = vmul.f32 %v841, %v857
        %v874 = vmul.f32 %v842, %v858
        %v875 = vmul.f32 %v843, %v859
        %v876 = vmul.f32 %v844, %v860
        %v877 = vmul.f32 %v845, %v861
        %v878 = vmul.f32 %v846, %v862
        %v879 = vmul.f32 %v847, %v863
        %v880 = vmul.f32 %v848, %v864
        %v881 = vadd.f32 %v486, %v865
        %v882 = vadd.f32 %v491, %v866
        %v883 = vadd.f32 %v496, %v867
        %v884 = vadd.f32 %v501, %v868
        %v885 = vadd.f32 %v506, %v869
        %v886 = vadd.f32 %v511, %v870
        %v887 = vadd.f32 %v516, %v871
        %v888 = vadd.f32 %v521, %v872
        %v889 = vadd.f32 %v526, %v873
        %v890 = vadd.f32 %v531, %v874
        %v891 = vadd.f32 %v536, %v875
        %v892 = vadd.f32 %v541, %v876
        %v893 = vadd.f32 %v546, %v877
        %v894 = vadd.f32 %v551, %v878
        %v895 = vadd.f32 %v556, %v879
        %v896 = vadd.f32 %v561, %v880
        %v897 = vld [vmem:[#allocation7] sm:$0xff]
        %v898 = vld [vmem:[#allocation7 + $0x8] sm:$0xff]
        %v899 = vld [vmem:[#allocation7 + $0x10] sm:$0xff]
        %v900 = vld [vmem:[#allocation7 + $0x18] sm:$0xff]
        %v901 = vld [vmem:[#allocation7 + $0x20] sm:$0xff]
        %v902 = vld [vmem:[#allocation7 + $0x28] sm:$0xff]
        %v903 = vld [vmem:[#allocation7 + $0x30] sm:$0xff]
        %v904 = vld [vmem:[#allocation7 + $0x38] sm:$0xff]
        %v905 = vld [vmem:[#allocation7 + $0x40] sm:$0xff]
        %v906 = vld [vmem:[#allocation7 + $0x48] sm:$0xff]
        %v907 = vld [vmem:[#allocation7 + $0x50] sm:$0xff]
        %v908 = vld [vmem:[#allocation7 + $0x58] sm:$0xff]
        %v909 = vld [vmem:[#allocation7 + $0x60] sm:$0xff]
        %v910 = vld [vmem:[#allocation7 + $0x68] sm:$0xff]
        %v911 = vld [vmem:[#allocation7 + $0x70] sm:$0xff]
        %v912 = vld [vmem:[#allocation7 + $0x78] sm:$0xff]
        %v913 = vld [vmem:[#allocation7 + $0x80] sm:$0xff]
        %v914 = vld [vmem:[#allocation7 + $0x88] sm:$0xff]
        %v915 = vld [vmem:[#allocation7 + $0x90] sm:$0xff]
        %v916 = vld [vmem:[#allocation7 + $0x98] sm:$0xff]
        %v917 = vld [vmem:[#allocation7 + $0xa0] sm:$0xff]
        %v918 = vld [vmem:[#allocation7 + $0xa8] sm:$0xff]
        %v919 = vld [vmem:[#allocation7 + $0xb0] sm:$0xff]
        %v920 = vld [vmem:[#allocation7 + $0xb8] sm:$0xff]
        %v921 = vld [vmem:[#allocation7 + $0xc0] sm:$0xff]
        %v922 = vld [vmem:[#allocation7 + $0xc8] sm:$0xff]
        %v923 = vld [vmem:[#allocation7 + $0xd0] sm:$0xff]
        %v924 = vld [vmem:[#allocation7 + $0xd8] sm:$0xff]
        %v925 = vld [vmem:[#allocation7 + $0xe0] sm:$0xff]
        %v926 = vld [vmem:[#allocation7 + $0xe8] sm:$0xff]
        %v927 = vld [vmem:[#allocation7 + $0xf0] sm:$0xff]
        %v928 = vld [vmem:[#allocation7 + $0xf8] sm:$0xff]
        %v929 = vld [vmem:[%s5] sm:$0x3]
        %v931 = vlaneseq
        %v932 = vshrl.u32 %v931, 7
        %v933 = vsub.s32 0, %v932
        %v934 = vrot.slane %v929, %v933
        %v935 = vlaneseq
        %v936 = vshrl.u32 %v935, 7
        %v937 = vsub.s32 1, %v936
        %v938 = vrot.slane %v929, %v937
        %941 = vmatprep.subr.mxu0 %v898
        %942 = vmatpush1.msra.mxu0 %v897
        %943 = vmatprep.subr.mxu0 %v900
        %944 = vmatpush1.msra.mxu0 %v899
        %945 = vmatprep.subr.mxu0 %v902
        %946 = vmatpush1.msra.mxu0 %v901
        %947 = vmatprep.subr.mxu0 %v904
        %948 = vmatpush1.msra.mxu0 %v903
        %949 = vmatprep.subr.mxu0 %v906
        %950 = vmatpush1.msra.mxu0 %v905
        %951 = vmatprep.subr.mxu0 %v908
        %952 = vmatpush1.msra.mxu0 %v907
        %953 = vmatprep.subr.mxu0 %v910
        %954 = vmatpush1.msra.mxu0 %v909
        %955 = vmatprep.subr.mxu0 %v912
        %956 = vmatpush1.msra.mxu0 %v911
        %957 = vmatprep.subr.mxu0 %v914
        %958 = vmatpush1.msra.mxu0 %v913
        %959 = vmatprep.subr.mxu0 %v916
        %960 = vmatpush1.msra.mxu0 %v915
        %961 = vmatprep.subr.mxu0 %v918
        %962 = vmatpush1.msra.mxu0 %v917
        %963 = vmatprep.subr.mxu0 %v920
        %964 = vmatpush1.msra.mxu0 %v919
        %965 = vmatprep.subr.mxu0 %v922
        %966 = vmatpush1.msra.mxu0 %v921
        %967 = vmatprep.subr.mxu0 %v924
        %968 = vmatpush1.msra.mxu0 %v923
        %969 = vmatprep.subr.mxu0 %v926
        %970 = vmatpush1.msra.mxu0 %v925
        %971 = vmatprep.subr.mxu0 %v928
        %972 = vmatpush1.msra.mxu0 %v927
        %973 = vmatprep.subr.mxu0 0.0
        %974 = vmatpush1.msra.mxu0 0.0
        %975 = vmatprep.subr.mxu0 0.0
        %976 = vmatpush1.msra.mxu0 0.0
        %977 = vmatprep.subr.mxu0 0.0
        %978 = vmatpush1.msra.mxu0 0.0
        %979 = vmatprep.subr.mxu0 0.0
        %980 = vmatpush1.msra.mxu0 0.0
        %981 = vmatprep.subr.mxu0 0.0
        %982 = vmatpush1.msra.mxu0 0.0
        %983 = vmatprep.subr.mxu0 0.0
        %984 = vmatpush1.msra.mxu0 0.0
        %985 = vmatprep.subr.mxu0 0.0
        %986 = vmatpush1.msra.mxu0 0.0
        %987 = vmatprep.subr.mxu0 0.0
        %988 = vmatpush1.msra.mxu0 0.0
        %989 = vmatprep.subr.mxu0 0.0
        %990 = vmatpush1.msra.mxu0 0.0
        %991 = vmatprep.subr.mxu0 0.0
        %992 = vmatpush1.msra.mxu0 0.0
        %993 = vmatprep.subr.mxu0 0.0
        %994 = vmatpush1.msra.mxu0 0.0
        %995 = vmatprep.subr.mxu0 0.0
        %996 = vmatpush1.msra.mxu0 0.0
        %997 = vmatprep.subr.mxu0 0.0
        %998 = vmatpush1.msra.mxu0 0.0
        %999 = vmatprep.subr.mxu0 0.0
        %1000 = vmatpush1.msra.mxu0 0.0
        %1001 = vmatprep.subr.mxu0 0.0
        %1002 = vmatpush1.msra.mxu0 0.0
        %1003 = vmatprep.subr.mxu0 0.0
        %1004 = vmatpush1.msra.mxu0 0.0
        %1005 = vmatprep.mubr.f32.mxu0 0.0
        %1006 = vmatmul.mubr.f32.gmra.mrb[0].mxu0 %v881
        %v1007 = vpop.f32.mrb[0].mxu0
        %v1008 = vadd.f32 %v934, %v1007
        %v1009 = vpop.f32.mrb[0].mxu0
        %v1010 = vadd.f32 %v938, %v1009
        %1011 = vmatprep.mubr.f32.mxu0 0.0
        %1012 = vmatmul.mubr.f32.gmra.mrb[0].mxu0 %v882
        %v1013 = vpop.f32.mrb[0].mxu0
        %v1014 = vadd.f32 %v934, %v1013
        %v1015 = vpop.f32.mrb[0].mxu0
        %v1016 = vadd.f32 %v938, %v1015
        %1017 = vmatprep.mubr.f32.mxu0 0.0
        %1018 = vmatmul.mubr.f32.gmra.mrb[0].mxu0 %v883
        %v1019 = vpop.f32.mrb[0].mxu0
        %v1020 = vadd.f32 %v934, %v1019
        %v1021 = vpop.f32.mrb[0].mxu0
        %v1022 = vadd.f32 %v938, %v1021
        %1023 = vmatprep.mubr.f32.mxu0 0.0
        %1024 = vmatmul.mubr.f32.gmra.mrb[0].mxu0 %v884
        %v1025 = vpop.f32.mrb[0].mxu0
        %v1026 = vadd.f32 %v934, %v1025
        %v1027 = vpop.f32.mrb[0].mxu0
        %v1028 = vadd.f32 %v938, %v1027
        %1029 = vmatprep.mubr.f32.mxu0 0.0
        %1030 = vmatmul.mubr.f32.gmra.mrb[0].mxu0 %v885
        %v1031 = vpop.f32.mrb[0].mxu0
        %v1032 = vadd.f32 %v934, %v1031
        %v1033 = vpop.f32.mrb[0].mxu0
        %v1034 = vadd.f32 %v938, %v1033
        %1035 = vmatprep.mubr.f32.mxu0 0.0
        %1036 = vmatmul.mubr.f32.gmra.mrb[0].mxu0 %v886
        %v1037 = vpop.f32.mrb[0].mxu0
        %v1038 = vadd.f32 %v934, %v1037
        %v1039 = vpop.f32.mrb[0].mxu0
        %v1040 = vadd.f32 %v938, %v1039
        %1041 = vmatprep.mubr.f32.mxu0 0.0
        %1042 = vmatmul.mubr.f32.gmra.mrb[0].mxu0 %v887
        %v1043 = vpop.f32.mrb[0].mxu0
        %v1044 = vadd.f32 %v934, %v1043
        %v1045 = vpop.f32.mrb[0].mxu0
        %v1046 = vadd.f32 %v938, %v1045
        %1047 = vmatprep.mubr.f32.mxu0 0.0
        %1048 = vmatmul.mubr.f32.gmra.mrb[0].mxu0 %v888
        %v1049 = vpop.f32.mrb[0].mxu0
        %v1050 = vadd.f32 %v934, %v1049
        %v1051 = vpop.f32.mrb[0].mxu0
        %v1052 = vadd.f32 %v938, %v1051
        %1053 = vmatprep.mubr.f32.mxu0 0.0
        %1054 = vmatmul.mubr.f32.gmra.mrb[0].mxu0 %v889
        %v1055 = vpop.f32.mrb[0].mxu0
        %v1056 = vadd.f32 %v934, %v1055
        %v1057 = vpop.f32.mrb[0].mxu0
        %v1058 = vadd.f32 %v938, %v1057
        %1059 = vmatprep.mubr.f32.mxu0 0.0
        %1060 = vmatmul.mubr.f32.gmra.mrb[0].mxu0 %v890
        %v1061 = vpop.f32.mrb[0].mxu0
        %v1062 = vadd.f32 %v934, %v1061
        %v1063 = vpop.f32.mrb[0].mxu0
        %v1064 = vadd.f32 %v938, %v1063
        %1065 = vmatprep.mubr.f32.mxu0 0.0
        %1066 = vmatmul.mubr.f32.gmra.mrb[0].mxu0 %v891
        %v1067 = vpop.f32.mrb[0].mxu0
        %v1068 = vadd.f32 %v934, %v1067
        %v1069 = vpop.f32.mrb[0].mxu0
        %v1070 = vadd.f32 %v938, %v1069
        %1071 = vmatprep.mubr.f32.mxu0 0.0
        %1072 = vmatmul.mubr.f32.gmra.mrb[0].mxu0 %v892
        %v1073 = vpop.f32.mrb[0].mxu0
        %v1074 = vadd.f32 %v934, %v1073
        %v1075 = vpop.f32.mrb[0].mxu0
        %v1076 = vadd.f32 %v938, %v1075
        %1077 = vmatprep.mubr.f32.mxu0 0.0
        %1078 = vmatmul.mubr.f32.gmra.mrb[0].mxu0 %v893
        %v1079 = vpop.f32.mrb[0].mxu0
        %v1080 = vadd.f32 %v934, %v1079
        %v1081 = vpop.f32.mrb[0].mxu0
        %v1082 = vadd.f32 %v938, %v1081
        %1083 = vmatprep.mubr.f32.mxu0 0.0
        %1084 = vmatmul.mubr.f32.gmra.mrb[0].mxu0 %v894
        %v1085 = vpop.f32.mrb[0].mxu0
        %v1086 = vadd.f32 %v934, %v1085
        %v1087 = vpop.f32.mrb[0].mxu0
        %v1088 = vadd.f32 %v938, %v1087
        %1089 = vmatprep.mubr.f32.mxu0 0.0
        %1090 = vmatmul.mubr.f32.gmra.mrb[0].mxu0 %v895
        %v1091 = vpop.f32.mrb[0].mxu0
        %v1092 = vadd.f32 %v934, %v1091
        %v1093 = vpop.f32.mrb[0].mxu0
        %v1094 = vadd.f32 %v938, %v1093
        %1095 = vmatprep.mubr.f32.mxu0 0.0
        %1096 = vmatmul.mubr.f32.gmra.mrb[0].mxu0 %v896
        %v1097 = vpop.f32.mrb[0].mxu0
        %v1098 = vadd.f32 %v934, %v1097
        %v1099 = vpop.f32.mrb[0].mxu0
        %v1100 = vadd.f32 %v938, %v1099
        %1101 = vdwg.mxu0
        %v1102 = vsub.f32 0.0, %v1008
        %v1103 = vsub.f32 0.0, %v1014
        %v1104 = vsub.f32 0.0, %v1020
        %v1105 = vsub.f32 0.0, %v1026
        %v1106 = vsub.f32 0.0, %v1032
        %v1107 = vsub.f32 0.0, %v1038
        %v1108 = vsub.f32 0.0, %v1044
        %v1109 = vsub.f32 0.0, %v1050
        %v1110 = vsub.f32 0.0, %v1056
        %v1111 = vsub.f32 0.0, %v1062
        %v1112 = vsub.f32 0.0, %v1068
        %v1113 = vsub.f32 0.0, %v1074
        %v1114 = vsub.f32 0.0, %v1080
        %v1115 = vsub.f32 0.0, %v1086
        %v1116 = vsub.f32 0.0, %v1092
        %v1117 = vsub.f32 0.0, %v1098
        %v1118 = vmul.f32 %v1102, 1.442695
        %v1119 = vpow.pop %v1118
        %v1120 = vmul.f32 %v1103, 1.442695
        %v1121 = vpow.pop %v1120
        %v1122 = vmul.f32 %v1104, 1.442695
        %v1123 = vpow.pop %v1122
        %v1124 = vmul.f32 %v1105, 1.442695
        %v1125 = vpow.pop %v1124
        %v1126 = vmul.f32 %v1106, 1.442695
        %v1127 = vpow.pop %v1126
        %v1128 = vmul.f32 %v1107, 1.442695
        %v1129 = vpow.pop %v1128
        %v1130 = vmul.f32 %v1108, 1.442695
        %v1131 = vpow.pop %v1130
        %v1132 = vmul.f32 %v1109, 1.442695
        %v1133 = vpow.pop %v1132
        %v1134 = vmul.f32 %v1110, 1.442695
        %v1135 = vpow.pop %v1134
        %v1136 = vmul.f32 %v1111, 1.442695
        %v1137 = vpow.pop %v1136
        %v1138 = vmul.f32 %v1112, 1.442695
        %v1139 = vpow.pop %v1138
        %v1140 = vmul.f32 %v1113, 1.442695
        %v1141 = vpow.pop %v1140
        %v1142 = vmul.f32 %v1114, 1.442695
        %v1143 = vpow.pop %v1142
        %v1144 = vmul.f32 %v1115, 1.442695
        %v1145 = vpow.pop %v1144
        %v1146 = vmul.f32 %v1116, 1.442695
        %v1147 = vpow.pop %v1146
        %v1148 = vmul.f32 %v1117, 1.442695
        %v1149 = vpow.pop %v1148
        %v1150 = vadd.f32 %v1119, 1.0
        %v1151 = vadd.f32 %v1121, 1.0
        %v1152 = vadd.f32 %v1123, 1.0
        %v1153 = vadd.f32 %v1125, 1.0
        %v1154 = vadd.f32 %v1127, 1.0
        %v1155 = vadd.f32 %v1129, 1.0
        %v1156 = vadd.f32 %v1131, 1.0
        %v1157 = vadd.f32 %v1133, 1.0
        %v1158 = vadd.f32 %v1135, 1.0
        %v1159 = vadd.f32 %v1137, 1.0
        %v1160 = vadd.f32 %v1139, 1.0
        %v1161 = vadd.f32 %v1141, 1.0
        %v1162 = vadd.f32 %v1143, 1.0
        %v1163 = vadd.f32 %v1145, 1.0
        %v1164 = vadd.f32 %v1147, 1.0
        %v1165 = vadd.f32 %v1149, 1.0
        %v1166 = vrcp.pop %v1150
        %v1167 = vrcp.pop %v1151
        %v1168 = vrcp.pop %v1152
        %v1169 = vrcp.pop %v1153
        %v1170 = vrcp.pop %v1154
        %v1171 = vrcp.pop %v1155
        %v1172 = vrcp.pop %v1156
        %v1173 = vrcp.pop %v1157
        %v1174 = vrcp.pop %v1158
        %v1175 = vrcp.pop %v1159
        %v1176 = vrcp.pop %v1160
        %v1177 = vrcp.pop %v1161
        %v1178 = vrcp.pop %v1162
        %v1179 = vrcp.pop %v1163
        %v1180 = vrcp.pop %v1164
        %v1181 = vrcp.pop %v1165
        %v1182 = vsub.f32 %v1010, %v881
        %v1183 = vsub.f32 %v1016, %v882
        %v1184 = vsub.f32 %v1022, %v883
        %v1185 = vsub.f32 %v1028, %v884
        %v1186 = vsub.f32 %v1034, %v885
        %v1187 = vsub.f32 %v1040, %v886
        %v1188 = vsub.f32 %v1046, %v887
        %v1189 = vsub.f32 %v1052, %v888
        %v1190 = vsub.f32 %v1058, %v889
        %v1191 = vsub.f32 %v1064, %v890
        %v1192 = vsub.f32 %v1070, %v891
        %v1193 = vsub.f32 %v1076, %v892
        %v1194 = vsub.f32 %v1082, %v893
        %v1195 = vsub.f32 %v1088, %v894
        %v1196 = vsub.f32 %v1094, %v895
        %v1197 = vsub.f32 %v1100, %v896
        %v1198 = vmul.f32 %v1166, %v1182
        %v1199 = vmul.f32 %v1167, %v1183
        %v1200 = vmul.f32 %v1168, %v1184
        %v1201 = vmul.f32 %v1169, %v1185
        %v1202 = vmul.f32 %v1170, %v1186
        %v1203 = vmul.f32 %v1171, %v1187
        %v1204 = vmul.f32 %v1172, %v1188
        %v1205 = vmul.f32 %v1173, %v1189
        %v1206 = vmul.f32 %v1174, %v1190
        %v1207 = vmul.f32 %v1175, %v1191
        %v1208 = vmul.f32 %v1176, %v1192
        %v1209 = vmul.f32 %v1177, %v1193
        %v1210 = vmul.f32 %v1178, %v1194
        %v1211 = vmul.f32 %v1179, %v1195
        %v1212 = vmul.f32 %v1180, %v1196
        %v1213 = vmul.f32 %v1181, %v1197
        %v1214 = vadd.f32 %v881, %v1198
        %v1215 = vadd.f32 %v882, %v1199
        %v1216 = vadd.f32 %v883, %v1200
        %v1217 = vadd.f32 %v884, %v1201
        %v1218 = vadd.f32 %v885, %v1202
        %v1219 = vadd.f32 %v886, %v1203
        %v1220 = vadd.f32 %v887, %v1204
        %v1221 = vadd.f32 %v888, %v1205
        %v1222 = vadd.f32 %v889, %v1206
        %v1223 = vadd.f32 %v890, %v1207
        %v1224 = vadd.f32 %v891, %v1208
        %v1225 = vadd.f32 %v892, %v1209
        %v1226 = vadd.f32 %v893, %v1210
        %v1227 = vadd.f32 %v894, %v1211
        %v1228 = vadd.f32 %v895, %v1212
        %v1229 = vadd.f32 %v896, %v1213
        %1230 = vxpose.xlu0.b32.start [1/16] %v1214, 128
        %1231 = vxpose.xlu0.b32.cont [2/16] %v1215, 128
        %1232 = vxpose.xlu0.b32.cont [3/16] %v1216, 128
        %1233 = vxpose.xlu0.b32.cont [4/16] %v1217, 128
        %1234 = vxpose.xlu0.b32.cont [5/16] %v1218, 128
        %1235 = vxpose.xlu0.b32.cont [6/16] %v1219, 128
        %1236 = vxpose.xlu0.b32.cont [7/16] %v1220, 128
        %1237 = vxpose.xlu0.b32.cont [8/16] %v1221, 128
        %1238 = vxpose.xlu0.b32.cont [9/16] %v1222, 128
        %1239 = vxpose.xlu0.b32.cont [10/16] %v1223, 128
        %1240 = vxpose.xlu0.b32.cont [11/16] %v1224, 128
        %1241 = vxpose.xlu0.b32.cont [12/16] %v1225, 128
        %1242 = vxpose.xlu0.b32.cont [13/16] %v1226, 128
        %1243 = vxpose.xlu0.b32.cont [14/16] %v1227, 128
        %1244 = vxpose.xlu0.b32.cont [15/16] %v1228, 128
        %1245 = vxpose.xlu0.b32.end [16/16] %v1229, 128
        %v1246 = vpop.trf.xlu0
        %v1247 = vpop.trf.xlu0
        %v1248 = vpop.trf.xlu0
        %v1249 = vpop.trf.xlu0
        %v1250 = vpop.trf.xlu0
        %v1251 = vpop.trf.xlu0
        %v1252 = vpop.trf.xlu0
        %v1253 = vpop.trf.xlu0
        %v1254 = vpop.trf.xlu0
        %v1255 = vpop.trf.xlu0
        %v1256 = vpop.trf.xlu0
        %v1257 = vpop.trf.xlu0
        %v1258 = vpop.trf.xlu0
        %v1259 = vpop.trf.xlu0
        %v1260 = vpop.trf.xlu0
        %v1261 = vpop.trf.xlu0
        %1262 = vst [vmem:[%s345] sm:$0xff] %v1246
        %1263 = vst [vmem:[%s345 + $0x8] sm:$0xff] %v1247
        %1264 = vst [vmem:[%s345 + $0x10] sm:$0xff] %v1248
        %1265 = vst [vmem:[%s345 + $0x18] sm:$0xff] %v1249
        %1266 = vst [vmem:[%s345 + $0x20] sm:$0xff] %v1250
        %1267 = vst [vmem:[%s345 + $0x28] sm:$0xff] %v1251
        %1268 = vst [vmem:[%s345 + $0x30] sm:$0xff] %v1252
        %1269 = vst [vmem:[%s345 + $0x38] sm:$0xff] %v1253
        %1270 = vst [vmem:[%s345 + $0x40] sm:$0xff] %v1254
        %1271 = vst [vmem:[%s345 + $0x48] sm:$0xff] %v1255
        %1272 = vst [vmem:[%s345 + $0x50] sm:$0xff] %v1256
        %1273 = vst [vmem:[%s345 + $0x58] sm:$0xff] %v1257
        %p1274 = scmp.lt.s32.totalorder %s26, 1
        %s1275 = scalar_select %p1274, %s26, 1
        %p1276 = scmp.lt.s32.totalorder %s27, 0
        %s1277 = scalar_select %p1276, %s27, 0
        %s1278 = smul.addr %s1275, 12
        %s1279 = sadd.s32 %s1277, %s1278
        %s1280 = smul.addr %s1279, 8
        %s1281 = scalar_lea.vmem %s6, %s1280
        // Predicated region
        $region61: #{tpu_custom_call.1} parent=43 // pred_check
          %p1282 = pneg %p187
        $region62: #{tpu_custom_call.1} parent=43 // pred_check_branch
          %1284 = sbr.rel (%p1282) target = $region64
        $region63: #{tpu_custom_call.1} parent=43 // pred_region
          _
        $region64: #{tpu_custom_call.1} parent=43 // pred_fallthru
          _
      $region44: #{tpu_custom_call.1} parent=5 // pred_fallthru
        _
      %p1285 = scmp.le.s32.totalorder 2, %s17
      // Predicated region
      $region65: #{tpu_custom_call.1} parent=5 // pred_check
        %p1286 = pneg %p1285
      $region66: #{tpu_custom_call.1} parent=5 // pred_check_branch
        %1288 = sbr.rel (%p1286) target = $region68
      $region67: #{tpu_custom_call.1} parent=5 // pred_region
        %s1289 = ssub.s32 %s17, 2
        // Predicated region
        $region69: #{tpu_custom_call.1} parent=67 // pred_check
          %p1290 = pneg %p193
        $region70: #{tpu_custom_call.1} parent=67 // pred_check_branch
          %1292 = sbr.rel (%p1290) target = $region72
        $region71: #{tpu_custom_call.1} parent=67 // pred_region
          %p1293 = scmp.lt.s32.totalorder %s28, 1
          %s1294 = scalar_select %p1293, %s28, 1
          %p1295 = scmp.lt.s32.totalorder %s29, 0
          %s1296 = scalar_select %p1295, %s29, 0
          %s1297 = smul.addr %s1294, 12
          %s1298 = sadd.s32 %s1296, %s1297
          %s1299 = smul.addr %s1298, 8
          %s1300 = scalar_lea.vmem %s6, %s1299
        $region72: #{tpu_custom_call.1} parent=67 // pred_fallthru
          _
      $region68: #{tpu_custom_call.1} parent=5 // pred_fallthru
        _
    $region6: #{tpu_custom_call.1} parent=1 // loop_footer
      %s21 = sadd.s32 1, %s17
    $region7: #{tpu_custom_call.1} parent=1 // loop_footer_branch
      %16 = sbr.rel target = $region3
    $region8: #{tpu_custom_call.1} parent=1 // loop_exit
      _
    %1301 = vsyncpa [#allocation3], 1
    %s1302 = scalar_lea.sflag [#allocation3], 1
    %1303 = vsyncpa %s1302, 1
    %1304 = vsyncpa [#allocation5], 1
    %1305 = vsyncpa [#allocation8], 1

</llo_original>
